<compile_context>
chip_gen: v6e
topology: v6e:2x2x1
jax: 0.10.0
libtpu: 0.0.40
codegen_flags: <defaults>
</compile_context>

<pallas_src>
import jax
import jax.numpy as jnp
from jax.experimental import pallas as pl
from jax.experimental.pallas import tpu as pltpu


def _mlp_kernel(d_ref, p_ref, w1d_ref, w1p_ref, b1_ref, w2_ref, b2_ref, o_ref):
    """One batch tile: y = relu(d @ W1d + p @ W1p + b1) @ W2 + b2 (f32 accumulate)."""
    cdt = w1d_ref.dtype
    d = d_ref[...].astype(cdt)
    p = p_ref[...].astype(cdt)
    h = (
        jnp.dot(d, w1d_ref[...], preferred_element_type=jnp.float32)
        + jnp.dot(p, w1p_ref[...], preferred_element_type=jnp.float32)
        + b1_ref[...]
    )
    h = jnp.maximum(h, 0.0)  # ReLU
    y = jnp.dot(h.astype(cdt), w2_ref[...], preferred_element_type=jnp.float32) + b2_ref[...]
    o_ref[...] = y.astype(o_ref.dtype)


def _block_diag(w, pack):
    """(din, dout) -> block-diagonal (pack*din, pack*dout). Identity for pack == 1."""
    if pack == 1:
        return w
    din, dout = w.shape
    eye = jnp.eye(pack, dtype=w.dtype)
    return (eye[:, None, :, None] * w[None, :, None, :]).reshape(pack * din, pack * dout)


def patient_encoder(diags, procs, w1, b1, w2, b2, *, tile_b=4096, compute_dtype=None):
    """diags: (B, diag_num), procs: (B, proc_num) -> (B, emb).

    w1: (diag_num + proc_num, 2*emb), w2: (2*emb, emb); biases 1-D or (1, n).
    """
    B, diag_num = diags.shape
    Bq, proc_num = procs.shape
    assert Bq == B
    input_num, hidden = w1.shape
    assert input_num == diag_num + proc_num
    hidden2, emb = w2.shape
    assert hidden2 == hidden

    out_dtype = diags.dtype
    cdt = jnp.dtype(compute_dtype) if compute_dtype is not None else jnp.dtype(diags.dtype)

    # Row-packing factor: pack consecutive batch rows along the lane axis so the
    # output tile is 128 lanes wide (lane-dense stores, no masked vst).
    pack = 128 // emb if (0 < emb <= 128 and 128 % emb == 0) else 1
    while pack > 1 and B % pack != 0:
        pack //= 2
    Bp = B // pack

    # Free row-major reshapes (no data movement): row r holds `pack` patients.
    d4 = diags.reshape(Bp, pack * diag_num)
    p4 = procs.reshape(Bp, pack * proc_num)

    # Packed weights: block-diagonal replication => per-group independent matmuls.
    # (Tiny tensors; in a real model these would be precomputed once.)
    w1d = _block_diag(w1[:diag_num, :], pack).astype(cdt)
    w1p = _block_diag(w1[diag_num:, :], pack).astype(cdt)
    w2b = _block_diag(w2, pack).astype(cdt)
    b1b = jnp.tile(b1.reshape(1, hidden).astype(jnp.float32), (1, pack))
    b2b = jnp.tile(b2.reshape(1, emb).astype(jnp.float32), (1, pack))

    # Batch tile in packed rows: multiple of 8 sublanes, or the full array.
    tbp = max(1, min(tile_b, B) // pack)
    if tbp >= Bp:
        tbp = Bp
    else:
        tbp = max(8, (tbp // 8) * 8)
        tbp = min(tbp, Bp)
    grid = (pl.cdiv(Bp, tbp),)
    # NOTE: if tbp does not divide Bp, padded rows of the last block compute on
    # garbage input; their output rows are masked, so the result is still correct.
    # TODO(synk): for tiny B (e.g. B=8) a standalone pallas_call is pure launch
    # overhead -- fuse into the surrounding model or batch many patients per call.

    out = pl.pallas_call(
        _mlp_kernel,
        out_shape=jax.ShapeDtypeStruct((Bp, pack * emb), out_dtype),
        grid_spec=pl.GridSpec(
            grid=grid,
            in_specs=[
                pl.BlockSpec((tbp, pack * diag_num), lambda i: (i, 0)),
                pl.BlockSpec((tbp, pack * proc_num), lambda i: (i, 0)),
                pl.BlockSpec((pack * diag_num, pack * hidden), lambda i: (0, 0)),
                pl.BlockSpec((pack * proc_num, pack * hidden), lambda i: (0, 0)),
                pl.BlockSpec((1, pack * hidden), lambda i: (0, 0)),
                pl.BlockSpec((pack * hidden, pack * emb), lambda i: (0, 0)),
                pl.BlockSpec((1, pack * emb), lambda i: (0, 0)),
            ],
            out_specs=pl.BlockSpec((tbp, pack * emb), lambda i: (i, 0)),
        ),
        compiler_params=pltpu.CompilerParams(
            dimension_semantics=("parallel",),
            vmem_limit_bytes=32 * 1024 * 1024,
        ),
    )(d4, p4, w1d, w1p, b1b, w2b, b2b)

    return out.reshape(B, emb)


if __name__ == "__main__":
    # Shapes consistent with the module's forward:
    #   diag_num=16, proc_num=16 -> input_num=32; emb_num=32 -> hidden=64; batch=8
    B, diag_num, proc_num, emb_num = 8, 16, 16, 32
    input_num = diag_num + proc_num
    hidden = 2 * emb_num

    key = jax.random.PRNGKey(0)
    k_d, k_p, k_w1, k_b1, k_w2, k_b2 = jax.random.split(key, 6)

    diags = jax.random.normal(k_d, (B, diag_num), dtype=jnp.float32)
    procs = jax.random.normal(k_p, (B, proc_num), dtype=jnp.float32)

    # PyTorch-Linear-style uniform init, stored as (in, out) so the kernel does x @ W.
    bound1 = 1.0 / (input_num ** 0.5)
    w1 = jax.random.uniform(k_w1, (input_num, hidden), jnp.float32, -bound1, bound1)
    b1 = jax.random.uniform(k_b1, (hidden,), jnp.float32, -bound1, bound1)
    bound2 = 1.0 / (hidden ** 0.5)
    w2 = jax.random.uniform(k_w2, (hidden, emb_num), jnp.float32, -bound2, bound2)
    b2 = jax.random.uniform(k_b2, (emb_num,), jnp.float32, -bound2, bound2)

    # Pure-JAX reference (matches the PyTorch forward).
    x = jnp.concatenate([diags, procs], axis=1)
    ref = jnp.maximum(x @ w1 + b1, 0.0) @ w2 + b2

    # f32 path (tight check).
    out = patient_encoder(diags, procs, w1, b1, w2, b2)
    out = jax.block_until_ready(out)
    assert out.shape == (B, emb_num)
    assert jnp.allclose(out, ref, atol=1e-4, rtol=1e-4), float(jnp.max(jnp.abs(out - ref)))

    # bf16 compute path (v6e/v7x MXU-native operands, f32 accumulate) — loose check.
    out_bf16 = patient_encoder(
        diags.astype(jnp.bfloat16), procs.astype(jnp.bfloat16),
        w1, b1, w2, b2, compute_dtype=jnp.bfloat16)
    out_bf16 = jax.block_until_ready(out_bf16)
    assert out_bf16.shape == (B, emb_num)
    assert jnp.allclose(out_bf16.astype(jnp.float32), ref, atol=3e-2, rtol=3e-2)

    print("KERNEL_OK")
</pallas_src>

<mosaic_0001>
module attributes {stable_mosaic.version = 11 : i64} {
  func.func @_mlp_kernel(%arg0: i32, %arg1: memref<2x64xf32, #tpu.memory_space<vmem>>, %arg2: memref<2x64xf32, #tpu.memory_space<vmem>>, %arg3: memref<64x256xf32, #tpu.memory_space<vmem>>, %arg4: memref<64x256xf32, #tpu.memory_space<vmem>>, %arg5: memref<1x256xf32, #tpu.memory_space<vmem>>, %arg6: memref<256x128xf32, #tpu.memory_space<vmem>>, %arg7: memref<1x128xf32, #tpu.memory_space<vmem>>, %arg8: memref<2x128xf32, #tpu.memory_space<vmem>>) attributes {dimension_semantics = [#tpu.dimension_semantics<parallel>], iteration_bounds = array<i64: 1>, scalar_prefetch = 0 : i64, scratch_operands = 0 : i64, tpu.core_type = #tpu.core_type<tc>, window_params = [{transform_indices = @transform_0, window_bounds = array<i64: 2, 64>}, {transform_indices = @transform_1, window_bounds = array<i64: 2, 64>}, {pipeline_mode = #tpu.pipeline_mode<synchronous>, transform_indices = @transform_2, window_bounds = array<i64: 64, 256>}, {pipeline_mode = #tpu.pipeline_mode<synchronous>, transform_indices = @transform_3, window_bounds = array<i64: 64, 256>}, {pipeline_mode = #tpu.pipeline_mode<synchronous>, transform_indices = @transform_4, window_bounds = array<i64: 1, 256>}, {pipeline_mode = #tpu.pipeline_mode<synchronous>, transform_indices = @transform_5, window_bounds = array<i64: 256, 128>}, {pipeline_mode = #tpu.pipeline_mode<synchronous>, transform_indices = @transform_6, window_bounds = array<i64: 1, 128>}, {transform_indices = @transform_7, window_bounds = array<i64: 2, 128>}]} {
    %c0 = arith.constant 0 : index
    %c0_0 = arith.constant 0 : index
    %0 = vector.load %arg1[%c0, %c0_0] : memref<2x64xf32, #tpu.memory_space<vmem>>, vector<2x64xf32>
    %c0_1 = arith.constant 0 : index
    %c0_2 = arith.constant 0 : index
    %1 = vector.load %arg2[%c0_1, %c0_2] : memref<2x64xf32, #tpu.memory_space<vmem>>, vector<2x64xf32>
    %c0_3 = arith.constant 0 : index
    %c0_4 = arith.constant 0 : index
    %2 = vector.load %arg3[%c0_3, %c0_4] : memref<64x256xf32, #tpu.memory_space<vmem>>, vector<64x256xf32>
    %cst = arith.constant dense<0.000000e+00> : vector<2x256xf32>
    %3 = tpu.matmul %0, %2, %cst {dimension_numbers = #tpu.dot_dimension_numbers<[1], [0], [0], [1], [0, 0, 1, 1], [], []>} : vector<2x64xf32>, vector<64x256xf32>, vector<2x256xf32> -> vector<2x256xf32>
    %c0_5 = arith.constant 0 : index
    %c0_6 = arith.constant 0 : index
    %4 = vector.load %arg4[%c0_5, %c0_6] : memref<64x256xf32, #tpu.memory_space<vmem>>, vector<64x256xf32>
    %cst_7 = arith.constant dense<0.000000e+00> : vector<2x256xf32>
    %5 = tpu.matmul %1, %4, %cst_7 {dimension_numbers = #tpu.dot_dimension_numbers<[1], [0], [0], [1], [0, 0, 1, 1], [], []>} : vector<2x64xf32>, vector<64x256xf32>, vector<2x256xf32> -> vector<2x256xf32>
    %6 = arith.addf %3, %5 : vector<2x256xf32>
    %c0_8 = arith.constant 0 : index
    %c0_9 = arith.constant 0 : index
    %7 = vector.load %arg5[%c0_8, %c0_9] : memref<1x256xf32, #tpu.memory_space<vmem>>, vector<1x256xf32>
    %8 = vector.broadcast %7 : vector<1x256xf32> to vector<2x256xf32>
    %9 = arith.addf %6, %8 : vector<2x256xf32>
    %cst_10 = arith.constant 0.000000e+00 : f32
    %10 = vector.broadcast %cst_10 : f32 to vector<2x256xf32>
    %11 = arith.maximumf %9, %10 : vector<2x256xf32>
    %c0_11 = arith.constant 0 : index
    %c0_12 = arith.constant 0 : index
    %12 = vector.load %arg6[%c0_11, %c0_12] : memref<256x128xf32, #tpu.memory_space<vmem>>, vector<256x128xf32>
    %cst_13 = arith.constant dense<0.000000e+00> : vector<2x128xf32>
    %13 = tpu.matmul %11, %12, %cst_13 {dimension_numbers = #tpu.dot_dimension_numbers<[1], [0], [0], [1], [0, 0, 1, 1], [], []>} : vector<2x256xf32>, vector<256x128xf32>, vector<2x128xf32> -> vector<2x128xf32>
    %c0_14 = arith.constant 0 : index
    %c0_15 = arith.constant 0 : index
    %14 = vector.load %arg7[%c0_14, %c0_15] : memref<1x128xf32, #tpu.memory_space<vmem>>, vector<1x128xf32>
    %15 = vector.broadcast %14 : vector<1x128xf32> to vector<2x128xf32>
    %16 = arith.addf %13, %15 : vector<2x128xf32>
    %c0_16 = arith.constant 0 : index
    %c0_17 = arith.constant 0 : index
    %17 = vector.load %arg8[%c0_16, %c0_17] : memref<2x128xf32, #tpu.memory_space<vmem>>, vector<2x128xf32>
    tpu.vector_store %arg8[%c0_16, %c0_17], %16 {strides = array<i32>} : memref<2x128xf32, #tpu.memory_space<vmem>>, vector<2x128xf32>,
    return
  }
  func.func @transform_0(%arg0: i32) -> (i32, i32) {
    %c0_i32 = arith.constant 0 : i32
    %c0_i32_0 = arith.constant 0 : i32
    return %arg0, %c0_i32 : i32, i32
  }
  func.func @transform_1(%arg0: i32) -> (i32, i32) {
    %c0_i32 = arith.constant 0 : i32
    %c0_i32_0 = arith.constant 0 : i32
    return %arg0, %c0_i32 : i32, i32
  }
  func.func @transform_2(%arg0: i32) -> (i32, i32) {
    %c0_i32 = arith.constant 0 : i32
    %c0_i32_0 = arith.constant 0 : i32
    %c0_i32_1 = arith.constant 0 : i32
    return %c0_i32, %c0_i32_0 : i32, i32
  }
  func.func @transform_3(%arg0: i32) -> (i32, i32) {
    %c0_i32 = arith.constant 0 : i32
    %c0_i32_0 = arith.constant 0 : i32
    %c0_i32_1 = arith.constant 0 : i32
    return %c0_i32, %c0_i32_0 : i32, i32
  }
  func.func @transform_4(%arg0: i32) -> (i32, i32) {
    %c0_i32 = arith.constant 0 : i32
    %c0_i32_0 = arith.constant 0 : i32
    %c0_i32_1 = arith.constant 0 : i32
    return %c0_i32, %c0_i32_0 : i32, i32
  }
  func.func @transform_5(%arg0: i32) -> (i32, i32) {
    %c0_i32 = arith.constant 0 : i32
    %c0_i32_0 = arith.constant 0 : i32
    %c0_i32_1 = arith.constant 0 : i32
    return %c0_i32, %c0_i32_0 : i32, i32
  }
  func.func @transform_6(%arg0: i32) -> (i32, i32) {
    %c0_i32 = arith.constant 0 : i32
    %c0_i32_0 = arith.constant 0 : i32
    %c0_i32_1 = arith.constant 0 : i32
    return %c0_i32, %c0_i32_0 : i32, i32
  }
  func.func @transform_7(%arg0: i32) -> (i32, i32) {
    %c0_i32 = arith.constant 0 : i32
    %c0_i32_0 = arith.constant 0 : i32
    return %arg0, %c0_i32 : i32, i32
  }
}

</mosaic_0001>

<llo_original>
// kernel: tpu_custom_call.1
$region0: #{tpu_custom_call.1}
  #allocation0 [shape = 'u32[]', space=smem, size = 0x4, offset = 0x4, fixed_abs, tag = 'smem constant byte address 0x4 - core index']
  #allocation1 [shape = 'u32[144,128]{1,0:T(1,128)}', space=vmem, size = 0x12000, scoped, tag = 'internal scratch']
  %s0 = inlined_call_operand.hbm [shape: f32[2,64], index: 0, kind: input, shape index: {}]
  %s1 = inlined_call_operand.hbm [shape: f32[2,64], index: 1, kind: input, shape index: {}]
  %s2 = inlined_call_operand.hbm [shape: f32[64,256], index: 2, kind: input, shape index: {}]
  %s3 = inlined_call_operand.hbm [shape: f32[64,256], index: 3, kind: input, shape index: {}]
  %s4 = inlined_call_operand.vmem [shape: f32[1,256], index: 4, kind: input, shape index: {}]
  %s5 = inlined_call_operand.hbm [shape: f32[256,128], index: 5, kind: input, shape index: {}]
  %s6 = inlined_call_operand.vmem [shape: f32[1,128], index: 6, kind: input, shape index: {}]
  %s7 = inlined_call_operand.hbm [shape: f32[2,128], index: 7, kind: output, shape index: {}]
  %s8 = sld [smem:[#allocation0]]
  $region58: #{tpu_custom_call.1} parent=0
    _
  %s10 = ssub.s32 1, %s8
  %s11 = scalar_select 0, %s10, %s8
  $region1: #{tpu_custom_call.1} parent=0
    #allocation2 [shape = 'u8[1024]{0}', space=vmem, size = 0x400, scoped, tag = 'input window, operand 0, single buffered']
    #allocation3 [shape = 's32[1]{0}', space=sflag, size = 0x4, scoped, tag = 'scoped memory for tpu_custom_call.1']
    #allocation4 [shape = 's32[1]{0}', space=sflag, size = 0x4, scoped, tag = 'scoped memory for tpu_custom_call.1']
    #allocation5 [shape = 'u8[1024]{0}', space=vmem, size = 0x400, scoped, tag = 'input window, operand 1, single buffered']
    #allocation6 [shape = 's32[1]{0}', space=sflag, size = 0x4, scoped, tag = 'scoped memory for tpu_custom_call.1']
    #allocation7 [shape = 'u8[65536]{0}', space=vmem, size = 0x10000, scoped, tag = 'input window, operand 2, single buffered']
    #allocation8 [shape = 'u8[65536]{0}', space=vmem, size = 0x10000, scoped, tag = 'input window, operand 3, single buffered']
    #allocation9 [shape = 's32[1]{0}', space=sflag, size = 0x4, scoped, tag = 'scoped memory for tpu_custom_call.1']
    #allocation10 [shape = 'u8[131072]{0}', space=vmem, size = 0x20000, scoped, tag = 'input window, operand 5, single buffered']
    #allocation11 [shape = 'u8[1024]{0}', space=vmem, size = 0x400, scoped, tag = 'output window, operand 0, single buffered']
    %12 = vsyncpa [#allocation3], 0
    %13 = vsyncpa [#allocation6], 0
    %14 = vsyncpa [#allocation9], 0
    %15 = vsyncpa [#allocation4], 0
    // Predicated region
    $region2: #{tpu_custom_call.1} parent=1 // pred_check
      _
    $region3: #{tpu_custom_call.1} parent=1 // pred_check_branch
      %17 = sbr.rel (0) target = $region5
    $region4: #{tpu_custom_call.1} parent=1 // pred_region
      %s19 = ssub.s32 32, 32
      %20 = vsyncadd [#allocation3], %s19
      %s22 = sshll.u32 [#allocation2], 4
      %s23 = int_to_ptr.vmem [resolvable:$true] %s22
      %25 = dma.hbm_to_vmem [thread:$0]  %s0, 32, %s23, [#allocation3]
    $region5: #{tpu_custom_call.1} parent=1 // pred_fallthru
      _
    // Predicated region
    $region6: #{tpu_custom_call.1} parent=1 // pred_check
      _
    $region7: #{tpu_custom_call.1} parent=1 // pred_check_branch
      %27 = sbr.rel (0) target = $region9
    $region8: #{tpu_custom_call.1} parent=1 // pred_region
      %s29 = ssub.s32 32, 32
      %30 = vsyncadd [#allocation6], %s29
      %s32 = sshll.u32 [#allocation5], 4
      %s33 = int_to_ptr.vmem [resolvable:$true] %s32
      %35 = dma.hbm_to_vmem [thread:$0]  %s1, 32, %s33, [#allocation6]
    $region9: #{tpu_custom_call.1} parent=1 // pred_fallthru
      _
    // Predicated region
    $region10: #{tpu_custom_call.1} parent=1 // pred_check
      _
    $region11: #{tpu_custom_call.1} parent=1 // pred_check_branch
      %37 = sbr.rel (0) target = $region13
    $region12: #{tpu_custom_call.1} parent=1 // pred_region
      %s39 = ssub.s32 2048, 2048
      %40 = vsyncadd [#allocation6], %s39
      %s41 = sshll.u32 [#allocation7], 4
      %s42 = int_to_ptr.vmem [resolvable:$true] %s41
      %47 = dma.hbm_to_vmem [thread:$0]  %s2, 2048, %s42, [#allocation6], 256, 256, 16
    $region13: #{tpu_custom_call.1} parent=1 // pred_fallthru
      _
    // Predicated region
    $region14: #{tpu_custom_call.1} parent=1 // pred_check
      _
    $region15: #{tpu_custom_call.1} parent=1 // pred_check_branch
      %49 = sbr.rel (0) target = $region17
    $region16: #{tpu_custom_call.1} parent=1 // pred_region
      %s51 = ssub.s32 2048, 2048
      %52 = vsyncadd [#allocation9], %s51
      %s53 = sshll.u32 [#allocation8], 4
      %s54 = int_to_ptr.vmem [resolvable:$true] %s53
      %59 = dma.hbm_to_vmem [thread:$0]  %s3, 2048, %s54, [#allocation9], 256, 256, 16
    $region17: #{tpu_custom_call.1} parent=1 // pred_fallthru
      _
    // Predicated region
    $region18: #{tpu_custom_call.1} parent=1 // pred_check
      _
    $region19: #{tpu_custom_call.1} parent=1 // pred_check_branch
      %61 = sbr.rel (0) target = $region21
    $region20: #{tpu_custom_call.1} parent=1 // pred_region
      _
    $region21: #{tpu_custom_call.1} parent=1 // pred_fallthru
      _
    // Predicated region
    $region22: #{tpu_custom_call.1} parent=1 // pred_check
      _
    $region23: #{tpu_custom_call.1} parent=1 // pred_check_branch
      %63 = sbr.rel (0) target = $region25
    $region24: #{tpu_custom_call.1} parent=1 // pred_region
      %s65 = ssub.s32 4096, 4096
      %66 = vsyncadd [#allocation9], %s65
      %s67 = sshll.u32 [#allocation10], 4
      %s68 = int_to_ptr.vmem [resolvable:$true] %s67
      %73 = dma.hbm_to_vmem [thread:$0]  %s5, 4096, %s68, [#allocation9], 128, 128, 8
    $region25: #{tpu_custom_call.1} parent=1 // pred_fallthru
      _
    // Predicated region
    $region26: #{tpu_custom_call.1} parent=1 // pred_check
      _
    $region27: #{tpu_custom_call.1} parent=1 // pred_check_branch
      %75 = sbr.rel (0) target = $region29
    $region28: #{tpu_custom_call.1} parent=1 // pred_region
      _
    $region29: #{tpu_custom_call.1} parent=1 // pred_fallthru
      _
    // Predicated region
    $region30: #{tpu_custom_call.1} parent=1 // pred_check
      _
    $region31: #{tpu_custom_call.1} parent=1 // pred_check_branch
      %77 = sbr.rel (0) target = $region33
    $region32: #{tpu_custom_call.1} parent=1 // pred_region
      %78 = dma.done [#allocation3], 32
    $region33: #{tpu_custom_call.1} parent=1 // pred_fallthru
      _
    // Predicated region
    $region34: #{tpu_custom_call.1} parent=1 // pred_check
      _
    $region35: #{tpu_custom_call.1} parent=1 // pred_check_branch
      %80 = sbr.rel (0) target = $region37
    $region36: #{tpu_custom_call.1} parent=1 // pred_region
      %81 = dma.done [#allocation6], 32
    $region37: #{tpu_custom_call.1} parent=1 // pred_fallthru
      _
    // Predicated region
    $region38: #{tpu_custom_call.1} parent=1 // pred_check
      _
    $region39: #{tpu_custom_call.1} parent=1 // pred_check_branch
      %83 = sbr.rel (0) target = $region41
    $region40: #{tpu_custom_call.1} parent=1 // pred_region
      %84 = dma.done [#allocation6], 2048
    $region41: #{tpu_custom_call.1} parent=1 // pred_fallthru
      _
    // Predicated region
    $region42: #{tpu_custom_call.1} parent=1 // pred_check
      _
    $region43: #{tpu_custom_call.1} parent=1 // pred_check_branch
      %86 = sbr.rel (0) target = $region45
    $region44: #{tpu_custom_call.1} parent=1 // pred_region
      %87 = dma.done [#allocation9], 2048
    $region45: #{tpu_custom_call.1} parent=1 // pred_fallthru
      _
    // Predicated region
    $region46: #{tpu_custom_call.1} parent=1 // pred_check
      _
    $region47: #{tpu_custom_call.1} parent=1 // pred_check_branch
      %89 = sbr.rel (0) target = $region49
    $region48: #{tpu_custom_call.1} parent=1 // pred_region
      %90 = dma.done [#allocation9], 4096
    $region49: #{tpu_custom_call.1} parent=1 // pred_fallthru
      _
    %v91 = vld [vmem:[#allocation2] sm:$0x3]
    %v92 = vld [vmem:[#allocation5] sm:$0x3]
    %v93 = vld [vmem:[#allocation7] sm:$0xff]
    %v94 = vld [vmem:[#allocation7 + $0x8] sm:$0xff]
    %v95 = vld [vmem:[#allocation7 + $0x10] sm:$0xff]
    %v96 = vld [vmem:[#allocation7 + $0x18] sm:$0xff]
    %v97 = vld [vmem:[#allocation7 + $0x20] sm:$0xff]
    %v98 = vld [vmem:[#allocation7 + $0x28] sm:$0xff]
    %v99 = vld [vmem:[#allocation7 + $0x30] sm:$0xff]
    %v100 = vld [vmem:[#allocation7 + $0x38] sm:$0xff]
    %v101 = vld [vmem:[#allocation7 + $0x40] sm:$0xff]
    %v102 = vld [vmem:[#allocation7 + $0x48] sm:$0xff]
    %v103 = vld [vmem:[#allocation7 + $0x50] sm:$0xff]
    %v104 = vld [vmem:[#allocation7 + $0x58] sm:$0xff]
    %v105 = vld [vmem:[#allocation7 + $0x60] sm:$0xff]
    %v106 = vld [vmem:[#allocation7 + $0x68] sm:$0xff]
    %v107 = vld [vmem:[#allocation7 + $0x70] sm:$0xff]
    %v108 = vld [vmem:[#allocation7 + $0x78] sm:$0xff]
    %v109 = vld [vmem:[#allocation8] sm:$0xff]
    %v110 = vld [vmem:[#allocation8 + $0x8] sm:$0xff]
    %v111 = vld [vmem:[#allocation8 + $0x10] sm:$0xff]
    %v112 = vld [vmem:[#allocation8 + $0x18] sm:$0xff]
    %v113 = vld [vmem:[#allocation8 + $0x20] sm:$0xff]
    %v114 = vld [vmem:[#allocation8 + $0x28] sm:$0xff]
    %v115 = vld [vmem:[#allocation8 + $0x30] sm:$0xff]
    %v116 = vld [vmem:[#allocation8 + $0x38] sm:$0xff]
    %v117 = vld [vmem:[#allocation8 + $0x40] sm:$0xff]
    %v118 = vld [vmem:[#allocation8 + $0x48] sm:$0xff]
    %v119 = vld [vmem:[#allocation8 + $0x50] sm:$0xff]
    %v120 = vld [vmem:[#allocation8 + $0x58] sm:$0xff]
    %v121 = vld [vmem:[#allocation8 + $0x60] sm:$0xff]
    %v122 = vld [vmem:[#allocation8 + $0x68] sm:$0xff]
    %v123 = vld [vmem:[#allocation8 + $0x70] sm:$0xff]
    %v124 = vld [vmem:[#allocation8 + $0x78] sm:$0xff]
    %vm125 = vcmask 523264
    %v127 = vsel %vm125, %v92, 0
    %129 = vmatprep.subr.mxu0 0.0
    %130 = vmatpush1.msra.mxu0 0.0
    %131 = vmatprep.subr.mxu0 0.0
    %132 = vmatpush1.msra.mxu0 0.0
    %133 = vmatprep.subr.mxu0 0.0
    %134 = vmatpush1.msra.mxu0 0.0
    %135 = vmatprep.subr.mxu0 0.0
    %136 = vmatpush1.msra.mxu0 0.0
    %137 = vmatprep.subr.mxu0 0.0
    %138 = vmatpush1.msra.mxu0 0.0
    %139 = vmatprep.subr.mxu0 0.0
    %140 = vmatpush1.msra.mxu0 0.0
    %141 = vmatprep.subr.mxu0 0.0
    %142 = vmatpush1.msra.mxu0 0.0
    %143 = vmatprep.subr.mxu0 0.0
    %144 = vmatpush1.msra.mxu0 0.0
    %145 = vmatprep.subr.mxu0 %v124
    %146 = vmatpush1.msra.mxu0 %v123
    %147 = vmatprep.subr.mxu0 %v122
    %148 = vmatpush1.msra.mxu0 %v121
    %149 = vmatprep.subr.mxu0 %v120
    %150 = vmatpush1.msra.mxu0 %v119
    %151 = vmatprep.subr.mxu0 %v118
    %152 = vmatpush1.msra.mxu0 %v117
    %153 = vmatprep.subr.mxu0 %v116
    %154 = vmatpush1.msra.mxu0 %v115
    %155 = vmatprep.subr.mxu0 %v114
    %156 = vmatpush1.msra.mxu0 %v113
    %157 = vmatprep.subr.mxu0 %v112
    %158 = vmatpush1.msra.mxu0 %v111
    %159 = vmatprep.subr.mxu0 %v110
    %160 = vmatpush1.msra.mxu0 %v109
    %161 = vmatprep.subr.mxu0 0.0
    %162 = vmatpush2.msra.mxu0 0.0
    %163 = vmatprep.subr.mxu0 0.0
    %164 = vmatpush2.msra.mxu0 0.0
    %165 = vmatprep.subr.mxu0 0.0
    %166 = vmatpush2.msra.mxu0 0.0
    %167 = vmatprep.subr.mxu0 0.0
    %168 = vmatpush2.msra.mxu0 0.0
    %169 = vmatprep.subr.mxu0 0.0
    %170 = vmatpush2.msra.mxu0 0.0
    %171 = vmatprep.subr.mxu0 0.0
    %172 = vmatpush2.msra.mxu0 0.0
    %173 = vmatprep.subr.mxu0 0.0
    %174 = vmatpush2.msra.mxu0 0.0
    %175 = vmatprep.subr.mxu0 0.0
    %176 = vmatpush2.msra.mxu0 0.0
    %177 = vmatprep.subr.mxu0 0.0
    %178 = vmatpush2.msra.mxu0 0.0
    %179 = vmatprep.subr.mxu0 0.0
    %180 = vmatpush2.msra.mxu0 0.0
    %181 = vmatprep.subr.mxu0 0.0
    %182 = vmatpush2.msra.mxu0 0.0
    %183 = vmatprep.subr.mxu0 0.0
    %184 = vmatpush2.msra.mxu0 0.0
    %185 = vmatprep.subr.mxu0 0.0
    %186 = vmatpush2.msra.mxu0 0.0
    %187 = vmatprep.subr.mxu0 0.0
    %188 = vmatpush2.msra.mxu0 0.0
    %189 = vmatprep.subr.mxu0 0.0
    %190 = vmatpush2.msra.mxu0 0.0
    %191 = vmatprep.subr.mxu0 0.0
    %192 = vmatpush2.msra.mxu0 0.0
    %193 = vmatprep.mubr.f32.mxu0 0.0
    %194 = vmatmul.mubr.f32.gmra.mxu0 %v127
    %v195 = vpop.f32.mrf.mxu0
    %v196 = vadd.f32 0.0, %v195
    %v197 = vpop.f32.mrf.mxu0
    %v198 = vadd.f32 0.0, %v197
    %199 = vdwg.mxu0
    %v201 = vsel %vm125, %v91, 0
    %203 = vmatprep.subr.mxu0 0.0
    %204 = vmatpush1.msra.mxu0 0.0
    %205 = vmatprep.subr.mxu0 0.0
    %206 = vmatpush1.msra.mxu0 0.0
    %207 = vmatprep.subr.mxu0 0.0
    %208 = vmatpush1.msra.mxu0 0.0
    %209 = vmatprep.subr.mxu0 0.0
    %210 = vmatpush1.msra.mxu0 0.0
    %211 = vmatprep.subr.mxu0 0.0
    %212 = vmatpush1.msra.mxu0 0.0
    %213 = vmatprep.subr.mxu0 0.0
    %214 = vmatpush1.msra.mxu0 0.0
    %215 = vmatprep.subr.mxu0 0.0
    %216 = vmatpush1.msra.mxu0 0.0
    %217 = vmatprep.subr.mxu0 0.0
    %218 = vmatpush1.msra.mxu0 0.0
    %219 = vmatprep.subr.mxu0 %v108
    %220 = vmatpush1.msra.mxu0 %v107
    %221 = vmatprep.subr.mxu0 %v106
    %222 = vmatpush1.msra.mxu0 %v105
    %223 = vmatprep.subr.mxu0 %v104
    %224 = vmatpush1.msra.mxu0 %v103
    %225 = vmatprep.subr.mxu0 %v102
    %226 = vmatpush1.msra.mxu0 %v101
    %227 = vmatprep.subr.mxu0 %v100
    %228 = vmatpush1.msra.mxu0 %v99
    %229 = vmatprep.subr.mxu0 %v98
    %230 = vmatpush1.msra.mxu0 %v97
    %231 = vmatprep.subr.mxu0 %v96
    %232 = vmatpush1.msra.mxu0 %v95
    %233 = vmatprep.subr.mxu0 %v94
    %234 = vmatpush1.msra.mxu0 %v93
    %235 = vmatprep.subr.mxu0 0.0
    %236 = vmatpush2.msra.mxu0 0.0
    %237 = vmatprep.subr.mxu0 0.0
    %238 = vmatpush2.msra.mxu0 0.0
    %239 = vmatprep.subr.mxu0 0.0
    %240 = vmatpush2.msra.mxu0 0.0
    %241 = vmatprep.subr.mxu0 0.0
    %242 = vmatpush2.msra.mxu0 0.0
    %243 = vmatprep.subr.mxu0 0.0
    %244 = vmatpush2.msra.mxu0 0.0
    %245 = vmatprep.subr.mxu0 0.0
    %246 = vmatpush2.msra.mxu0 0.0
    %247 = vmatprep.subr.mxu0 0.0
    %248 = vmatpush2.msra.mxu0 0.0
    %249 = vmatprep.subr.mxu0 0.0
    %250 = vmatpush2.msra.mxu0 0.0
    %251 = vmatprep.subr.mxu0 0.0
    %252 = vmatpush2.msra.mxu0 0.0
    %253 = vmatprep.subr.mxu0 0.0
    %254 = vmatpush2.msra.mxu0 0.0
    %255 = vmatprep.subr.mxu0 0.0
    %256 = vmatpush2.msra.mxu0 0.0
    %257 = vmatprep.subr.mxu0 0.0
    %258 = vmatpush2.msra.mxu0 0.0
    %259 = vmatprep.subr.mxu0 0.0
    %260 = vmatpush2.msra.mxu0 0.0
    %261 = vmatprep.subr.mxu0 0.0
    %262 = vmatpush2.msra.mxu0 0.0
    %263 = vmatprep.subr.mxu0 0.0
    %264 = vmatpush2.msra.mxu0 0.0
    %265 = vmatprep.subr.mxu0 0.0
    %266 = vmatpush2.msra.mxu0 0.0
    %267 = vmatprep.mubr.f32.mxu0 0.0
    %268 = vmatmul.mubr.f32.gmra.mxu0 %v201
    %v269 = vpop.f32.mrf.mxu0
    %v270 = vadd.f32 %v196, %v269
    %v271 = vpop.f32.mrf.mxu0
    %v272 = vadd.f32 %v198, %v271
    %273 = vdwg.mxu0
    %v274 = vld [vmem:[%s4] sm:$0x3]
    %v276 = vlaneseq
    %v277 = vshrl.u32 %v276, 7
    %v278 = vsub.s32 0, %v277
    %v279 = vrot.slane %v274, %v278
    %v280 = vlaneseq
    %v281 = vshrl.u32 %v280, 7
    %v282 = vsub.s32 1, %v281
    %v283 = vrot.slane %v274, %v282
    %v286 = vadd.f32 %v270, %v279
    %v287 = vadd.f32 %v272, %v283
    %v288 = vmax.f32 %v286, 0.0
    %v289 = vmax.f32 %v287, 0.0
    %v290 = vld [vmem:[#allocation10] sm:$0xff]
    %v291 = vld [vmem:[#allocation10 + $0x8] sm:$0xff]
    %v292 = vld [vmem:[#allocation10 + $0x10] sm:$0xff]
    %v293 = vld [vmem:[#allocation10 + $0x18] sm:$0xff]
    %v294 = vld [vmem:[#allocation10 + $0x20] sm:$0xff]
    %v295 = vld [vmem:[#allocation10 + $0x28] sm:$0xff]
    %v296 = vld [vmem:[#allocation10 + $0x30] sm:$0xff]
    %v297 = vld [vmem:[#allocation10 + $0x38] sm:$0xff]
    %v298 = vld [vmem:[#allocation10 + $0x40] sm:$0xff]
    %v299 = vld [vmem:[#allocation10 + $0x48] sm:$0xff]
    %v300 = vld [vmem:[#allocation10 + $0x50] sm:$0xff]
    %v301 = vld [vmem:[#allocation10 + $0x58] sm:$0xff]
    %v302 = vld [vmem:[#allocation10 + $0x60] sm:$0xff]
    %v303 = vld [vmem:[#allocation10 + $0x68] sm:$0xff]
    %v304 = vld [vmem:[#allocation10 + $0x70] sm:$0xff]
    %v305 = vld [vmem:[#allocation10 + $0x78] sm:$0xff]
    %v306 = vld [vmem:[#allocation10 + $0x80] sm:$0xff]
    %v307 = vld [vmem:[#allocation10 + $0x88] sm:$0xff]
    %v308 = vld [vmem:[#allocation10 + $0x90] sm:$0xff]
    %v309 = vld [vmem:[#allocation10 + $0x98] sm:$0xff]
    %v310 = vld [vmem:[#allocation10 + $0xa0] sm:$0xff]
    %v311 = vld [vmem:[#allocation10 + $0xa8] sm:$0xff]
    %v312 = vld [vmem:[#allocation10 + $0xb0] sm:$0xff]
    %v313 = vld [vmem:[#allocation10 + $0xb8] sm:$0xff]
    %v314 = vld [vmem:[#allocation10 + $0xc0] sm:$0xff]
    %v315 = vld [vmem:[#allocation10 + $0xc8] sm:$0xff]
    %v316 = vld [vmem:[#allocation10 + $0xd0] sm:$0xff]
    %v317 = vld [vmem:[#allocation10 + $0xd8] sm:$0xff]
    %v318 = vld [vmem:[#allocation10 + $0xe0] sm:$0xff]
    %v319 = vld [vmem:[#allocation10 + $0xe8] sm:$0xff]
    %v320 = vld [vmem:[#allocation10 + $0xf0] sm:$0xff]
    %v321 = vld [vmem:[#allocation10 + $0xf8] sm:$0xff]
    %v322 = vld [vmem:[%s6] sm:$0x1]
    %v324 = vlaneseq
    %v325 = vshrl.u32 %v324, 7
    %v326 = vsub.s32 0, %v325
    %v327 = vrot.slane %v322, %v326
    %329 = vmatprep.subr.mxu0 0.0
    %330 = vmatpush1.msra.mxu0 %v305
    %331 = vmatprep.subr.mxu0 0.0
    %332 = vmatpush1.msra.mxu0 %v304
    %333 = vmatprep.subr.mxu0 0.0
    %334 = vmatpush1.msra.mxu0 %v303
    %335 = vmatprep.subr.mxu0 0.0
    %336 = vmatpush1.msra.mxu0 %v302
    %337 = vmatprep.subr.mxu0 0.0
    %338 = vmatpush1.msra.mxu0 %v301
    %339 = vmatprep.subr.mxu0 0.0
    %340 = vmatpush1.msra.mxu0 %v300
    %341 = vmatprep.subr.mxu0 0.0
    %342 = vmatpush1.msra.mxu0 %v299
    %343 = vmatprep.subr.mxu0 0.0
    %344 = vmatpush1.msra.mxu0 %v298
    %345 = vmatprep.subr.mxu0 0.0
    %346 = vmatpush1.msra.mxu0 %v297
    %347 = vmatprep.subr.mxu0 0.0
    %348 = vmatpush1.msra.mxu0 %v296
    %349 = vmatprep.subr.mxu0 0.0
    %350 = vmatpush1.msra.mxu0 %v295
    %351 = vmatprep.subr.mxu0 0.0
    %352 = vmatpush1.msra.mxu0 %v294
    %353 = vmatprep.subr.mxu0 0.0
    %354 = vmatpush1.msra.mxu0 %v293
    %355 = vmatprep.subr.mxu0 0.0
    %356 = vmatpush1.msra.mxu0 %v292
    %357 = vmatprep.subr.mxu0 0.0
    %358 = vmatpush1.msra.mxu0 %v291
    %359 = vmatprep.subr.mxu0 0.0
    %360 = vmatpush1.msra.mxu0 %v290
    %361 = vmatprep.subr.mxu0 0.0
    %362 = vmatpush2.msra.mxu0 %v321
    %363 = vmatprep.subr.mxu0 0.0
    %364 = vmatpush2.msra.mxu0 %v320
    %365 = vmatprep.subr.mxu0 0.0
    %366 = vmatpush2.msra.mxu0 %v319
    %367 = vmatprep.subr.mxu0 0.0
    %368 = vmatpush2.msra.mxu0 %v318
    %369 = vmatprep.subr.mxu0 0.0
    %370 = vmatpush2.msra.mxu0 %v317
    %371 = vmatprep.subr.mxu0 0.0
    %372 = vmatpush2.msra.mxu0 %v316
    %373 = vmatprep.subr.mxu0 0.0
    %374 = vmatpush2.msra.mxu0 %v315
    %375 = vmatprep.subr.mxu0 0.0
    %376 = vmatpush2.msra.mxu0 %v314
    %377 = vmatprep.subr.mxu0 0.0
    %378 = vmatpush2.msra.mxu0 %v313
    %379 = vmatprep.subr.mxu0 0.0
    %380 = vmatpush2.msra.mxu0 %v312
    %381 = vmatprep.subr.mxu0 0.0
    %382 = vmatpush2.msra.mxu0 %v311
    %383 = vmatprep.subr.mxu0 0.0
    %384 = vmatpush2.msra.mxu0 %v310
    %385 = vmatprep.subr.mxu0 0.0
    %386 = vmatpush2.msra.mxu0 %v309
    %387 = vmatprep.subr.mxu0 0.0
    %388 = vmatpush2.msra.mxu0 %v308
    %389 = vmatprep.subr.mxu0 0.0
    %390 = vmatpush2.msra.mxu0 %v307
    %391 = vmatprep.subr.mxu0 0.0
    %392 = vmatpush2.msra.mxu0 %v306
    %393 = vmatprep.mubr.f32.mxu0 %v289
    %394 = vmatmul.mubr.f32.gmra.mxu0 %v288
    %v395 = vpop.f32.mrf.mxu0
    %v396 = vadd.f32 %v327, %v395
    %v397 = vpop.f32.mrf.mxu0
    %398 = vdwg.mxu0
    %399 = vst [vmem:[#allocation11] sm:$0x3] %v396
    // Predicated region
    $region50: #{tpu_custom_call.1} parent=1 // pred_check
      _
    $region51: #{tpu_custom_call.1} parent=1 // pred_check_branch
      %401 = sbr.rel (0) target = $region53
    $region52: #{tpu_custom_call.1} parent=1 // pred_region
      %s403 = ssub.s32 32, 32
      %404 = vsyncadd [#allocation4], %s403
      %s406 = sshll.u32 [#allocation11], 4
      %s407 = int_to_ptr.vmem [resolvable:$true] %s406
      %409 = dma.vmem_to_hbm [thread:$0]  %s407, 32, %s7, [#allocation4]
    $region53: #{tpu_custom_call.1} parent=1 // pred_fallthru
      _
    // Predicated region
    $region54: #{tpu_custom_call.1} parent=1 // pred_check
      _
    $region55: #{tpu_custom_call.1} parent=1 // pred_check_branch
      %411 = sbr.rel (0) target = $region57
    $region56: #{tpu_custom_call.1} parent=1 // pred_region
      %412 = dma.done [#allocation4], 32
    $region57: #{tpu_custom_call.1} parent=1 // pred_fallthru
      _
    %413 = vsyncpa [#allocation3], 1
    %414 = vsyncpa [#allocation6], 1
    %415 = vsyncpa [#allocation9], 1
    %416 = vsyncpa [#allocation4], 1

</llo_original>
